<compile_context>
chip_gen: v5e
topology: v5e:2x2
jax: 0.10.0
libtpu: 0.0.40
codegen_flags: <defaults>
</compile_context>

<pallas_src>
import functools

import jax
import jax.numpy as jnp
from jax.experimental import pallas as pl
from jax.experimental.pallas import tpu as pltpu


_REC_PER_ROW = 32      # records per 128-lane input row (4 features each)
_OUT_LANES = 64        # output lanes per row (2 features per record)


def _round_up(a, b):
    return ((a + b - 1) // b) * b


def _ge_kernel(x_ref, o_ref, *, inv_r, inv_l):
    # x_ref: (tb, 128) block of the flat (N, 4) buffer.
    #        lane p of a row = record (p // 4), feature (p % 4).
    # o_ref: (tb, 64) block of the flat (N, 2) buffer.
    #        lane q of a row = record (q // 2), feature (q % 2).
    f32 = jnp.float32
    d = x_ref[...].astype(f32)                    # always compute in f32

    # 0/1 gather matrices (128, 32): column k selects lane 4k + c.
    lane = jax.lax.broadcasted_iota(jnp.int32, (128, _REC_PER_ROW), 0)
    rec = jax.lax.broadcasted_iota(jnp.int32, (128, _REC_PER_ROW), 1)
    base = 4 * rec
    g_x = (lane == base).astype(f32)
    g_y = (lane == base + 1).astype(f32)
    g_a = (lane == base + 2).astype(f32)
    g_s = (lane == base + 3).astype(f32)

    xg = jnp.dot(d, g_x, preferred_element_type=f32)   # (tb, 32)
    yg = jnp.dot(d, g_y, preferred_element_type=f32)
    ag = jnp.dot(d, g_a, preferred_element_type=f32)
    sg = jnp.dot(d, g_s, preferred_element_type=f32)

    # Strength-reduced math: 1/l, 1/r, 1/0.05 folded at trace time.
    t = xg * inv_l
    expo = jnp.exp(-0.5 * (t * t) / (sg * sg))
    radius = (yg / (1.0 - 20.0 * ag * expo)) * inv_r
    cline = xg * (2.0 * inv_l)

    # 0/1 scatter matrices (32, 64): record k -> lane 2k (cline), 2k+1 (radius).
    k = jax.lax.broadcasted_iota(jnp.int32, (_REC_PER_ROW, _OUT_LANES), 0)
    q = jax.lax.broadcasted_iota(jnp.int32, (_REC_PER_ROW, _OUT_LANES), 1)
    s_c = (q == 2 * k).astype(f32)
    s_r = (q == 2 * k + 1).astype(f32)

    out = (jnp.dot(cline, s_c, preferred_element_type=f32)
           + jnp.dot(radius, s_r, preferred_element_type=f32))
    o_ref[...] = out.astype(o_ref.dtype)               # single full-block store


def ge_forward(x, *, r, l, tile_rows=8192):
    """JAX/Pallas equivalent of the PyTorch GE module forward."""
    assert tile_rows >= 8 and tile_rows % 8 == 0
    orig_dtype = x.dtype
    lead = x.shape[:-1]
    C = x.shape[-1]
    assert C >= 4, "GE requires last dim >= 4 (x, y, A, sigma)"
    r = float(r)
    l = float(l)
    inv_r = 1.0 / r
    inv_l = 1.0 / l

    x2d = x.reshape(-1, C)
    N = x2d.shape[0]
    if N == 0:
        return jnp.zeros((*lead, 2), orig_dtype)

    if C > 4:
        # TODO(synk): for wide-feature callers this slice is an extra HBM pass;
        # folding the 4-column selection into the in-kernel gather would remove it.
        x2d = x2d[:, :4]

    # Pad record count to a multiple of 32 so the flat buffer free-reshapes to
    # (R, 128).  Padded records use sigma=1, A=0 (finite result, no NaN that
    # could poison the selection matmuls); they are sliced off below.
    n_pad = _round_up(N, _REC_PER_ROW)
    if n_pad != N:
        pad = jnp.zeros((n_pad - N, 4), x2d.dtype).at[:, 3].set(1.0)
        x2d = jnp.concatenate([x2d, pad], axis=0)

    R = n_pad // _REC_PER_ROW
    x_rows = x2d.reshape(R, 128)        # free reshape: records interleaved on lanes

    # Tile: multiple of 8 sublanes (or full extent for tiny inputs); cap at
    # ceil(R/2) rounded to 8 so there are >= 2 grid steps whenever possible
    # (lets the "parallel" axis use both v7x TensorCores).
    if R <= 8:
        tb = R
    else:
        tb = min(tile_rows, max(8, _round_up(pl.cdiv(R, 2), 8)))
    grid = (pl.cdiv(R, tb),)

    kernel = functools.partial(_ge_kernel, inv_r=inv_r, inv_l=inv_l)

    out_rows = pl.pallas_call(
        kernel,
        out_shape=jax.ShapeDtypeStruct((R, _OUT_LANES), orig_dtype),
        grid_spec=pltpu.PrefetchScalarGridSpec(
            num_scalar_prefetch=0,
            grid=grid,
            in_specs=[pl.BlockSpec((tb, 128), lambda i: (i, 0))],
            out_specs=pl.BlockSpec((tb, _OUT_LANES), lambda i: (i, 0)),
        ),
        compiler_params=pltpu.CompilerParams(
            dimension_semantics=("parallel",),
            vmem_limit_bytes=32 * 1024 * 1024,
        ),
    )(x_rows)

    out2 = out_rows.reshape(n_pad, 2)   # free reshape back to record-major
    if n_pad != N:
        out2 = out2[:N]
    return out2.reshape(*lead, 2)


def ge_ref(x, *, r, l):
    x_case = x[..., 0:1]
    y_case = x[..., 1:2]
    A = x[..., 2:3]
    sigma = x[..., 3:4]
    radius = y_case / (1.0 - A / 0.05
                       * jnp.exp(-1.0 * (x_case / l) ** 2.0 / (2.0 * sigma ** 2.0))) / r
    cline = 2.0 * x_case / l
    return jnp.concatenate([cline, radius], axis=-1)


if __name__ == "__main__":
    key = jax.random.PRNGKey(0)
    k1, k2 = jax.random.split(key)

    # Module buffers (scalars) for the stenosis case.
    r_const = 2.0
    l_const = 1.5

    # Main case: last dim = 4 -> [x, y, A, sigma]; N = 512 records -> 2 grid steps.
    base = jax.random.normal(k1, (2, 256, 4), dtype=jnp.float32)
    x = base
    x = x.at[..., 2].set(0.005 * base[..., 2])          # small A -> denom away from 0
    x = x.at[..., 3].set(jnp.abs(base[..., 3]) + 0.5)   # sigma > 0

    out = jax.block_until_ready(ge_forward(x, r=r_const, l=l_const))
    ref = ge_ref(x, r=r_const, l=l_const)
    assert out.shape == (2, 256, 2), out.shape
    assert jnp.allclose(out, ref, atol=1e-5, rtol=1e-5), "mismatch vs reference"

    # Ragged case (N = 21, not a multiple of 32) exercising the pad path.
    base2 = jax.random.normal(k2, (3, 7, 4), dtype=jnp.float32)
    x2 = base2
    x2 = x2.at[..., 2].set(0.005 * base2[..., 2])
    x2 = x2.at[..., 3].set(jnp.abs(base2[..., 3]) + 0.5)

    out2 = jax.block_until_ready(ge_forward(x2, r=r_const, l=l_const))
    ref2 = ge_ref(x2, r=r_const, l=l_const)
    assert out2.shape == (3, 7, 2), out2.shape
    assert jnp.allclose(out2, ref2, atol=1e-5, rtol=1e-5), "mismatch vs reference (padded)"

    print("KERNEL_OK")
</pallas_src>

<mosaic_0001>
module attributes {stable_mosaic.version = 11 : i64} {
  func.func @_ge_kernel(%arg0: i32, %arg1: memref<8x128xf32, #tpu.memory_space<vmem>>, %arg2: memref<8x64xf32, #tpu.memory_space<vmem>>) attributes {dimension_semantics = [#tpu.dimension_semantics<parallel>], iteration_bounds = array<i64: 2>, scalar_prefetch = 0 : i64, scratch_operands = 0 : i64, tpu.core_type = #tpu.core_type<tc>, window_params = [{transform_indices = @transform_0, window_bounds = array<i64: 8, 128>}, {transform_indices = @transform_1, window_bounds = array<i64: 8, 64>}]} {
    %c0 = arith.constant 0 : index
    %c0_0 = arith.constant 0 : index
    %0 = vector.load %arg1[%c0, %c0_0] : memref<8x128xf32, #tpu.memory_space<vmem>>, vector<8x128xf32>
    %1 = tpu.iota {dimensions = array<i32: 0>} : vector<128x32xi32>
    %2 = tpu.iota {dimensions = array<i32: 1>} : vector<128x32xi32>
    %c4_i32 = arith.constant 4 : i32
    %3 = vector.broadcast %c4_i32 : i32 to vector<128x32xi32>
    %4 = arith.muli %3, %2 : vector<128x32xi32>
    %5 = arith.cmpi eq, %1, %4 : vector<128x32xi32>
    %6 = arith.extui %5 : vector<128x32xi1> to vector<128x32xi32>
    %7 = arith.sitofp %6 : vector<128x32xi32> to vector<128x32xf32>
    %c1_i32 = arith.constant 1 : i32
    %8 = vector.broadcast %c1_i32 : i32 to vector<128x32xi32>
    %9 = arith.addi %4, %8 : vector<128x32xi32>
    %10 = arith.cmpi eq, %1, %9 : vector<128x32xi32>
    %11 = arith.extui %10 : vector<128x32xi1> to vector<128x32xi32>
    %12 = arith.sitofp %11 : vector<128x32xi32> to vector<128x32xf32>
    %c2_i32 = arith.constant 2 : i32
    %13 = vector.broadcast %c2_i32 : i32 to vector<128x32xi32>
    %14 = arith.addi %4, %13 : vector<128x32xi32>
    %15 = arith.cmpi eq, %1, %14 : vector<128x32xi32>
    %16 = arith.extui %15 : vector<128x32xi1> to vector<128x32xi32>
    %17 = arith.sitofp %16 : vector<128x32xi32> to vector<128x32xf32>
    %c3_i32 = arith.constant 3 : i32
    %18 = vector.broadcast %c3_i32 : i32 to vector<128x32xi32>
    %19 = arith.addi %4, %18 : vector<128x32xi32>
    %20 = arith.cmpi eq, %1, %19 : vector<128x32xi32>
    %21 = arith.extui %20 : vector<128x32xi1> to vector<128x32xi32>
    %22 = arith.sitofp %21 : vector<128x32xi32> to vector<128x32xf32>
    %cst = arith.constant dense<0.000000e+00> : vector<8x32xf32>
    %23 = tpu.matmul %0, %7, %cst {dimension_numbers = #tpu.dot_dimension_numbers<[1], [0], [0], [1], [0, 0, 1, 1], [], []>} : vector<8x128xf32>, vector<128x32xf32>, vector<8x32xf32> -> vector<8x32xf32>
    %cst_1 = arith.constant dense<0.000000e+00> : vector<8x32xf32>
    %24 = tpu.matmul %0, %12, %cst_1 {dimension_numbers = #tpu.dot_dimension_numbers<[1], [0], [0], [1], [0, 0, 1, 1], [], []>} : vector<8x128xf32>, vector<128x32xf32>, vector<8x32xf32> -> vector<8x32xf32>
    %cst_2 = arith.constant dense<0.000000e+00> : vector<8x32xf32>
    %25 = tpu.matmul %0, %17, %cst_2 {dimension_numbers = #tpu.dot_dimension_numbers<[1], [0], [0], [1], [0, 0, 1, 1], [], []>} : vector<8x128xf32>, vector<128x32xf32>, vector<8x32xf32> -> vector<8x32xf32>
    %cst_3 = arith.constant dense<0.000000e+00> : vector<8x32xf32>
    %26 = tpu.matmul %0, %22, %cst_3 {dimension_numbers = #tpu.dot_dimension_numbers<[1], [0], [0], [1], [0, 0, 1, 1], [], []>} : vector<8x128xf32>, vector<128x32xf32>, vector<8x32xf32> -> vector<8x32xf32>
    %cst_4 = arith.constant 0.666666686 : f32
    %27 = vector.broadcast %cst_4 : f32 to vector<8x32xf32>
    %28 = arith.mulf %23, %27 : vector<8x32xf32>
    %29 = arith.mulf %28, %28 : vector<8x32xf32>
    %cst_5 = arith.constant -5.000000e-01 : f32
    %30 = vector.broadcast %cst_5 : f32 to vector<8x32xf32>
    %31 = arith.mulf %30, %29 : vector<8x32xf32>
    %32 = arith.mulf %26, %26 : vector<8x32xf32>
    %33 = arith.divf %31, %32 : vector<8x32xf32>
    %34 = math.exp %33 : vector<8x32xf32>
    %cst_6 = arith.constant 2.000000e+01 : f32
    %35 = vector.broadcast %cst_6 : f32 to vector<8x32xf32>
    %36 = arith.mulf %35, %25 : vector<8x32xf32>
    %37 = arith.mulf %36, %34 : vector<8x32xf32>
    %cst_7 = arith.constant 1.000000e+00 : f32
    %38 = vector.broadcast %cst_7 : f32 to vector<8x32xf32>
    %39 = arith.subf %38, %37 : vector<8x32xf32>
    %40 = arith.divf %24, %39 : vector<8x32xf32>
    %cst_8 = arith.constant 5.000000e-01 : f32
    %41 = vector.broadcast %cst_8 : f32 to vector<8x32xf32>
    %42 = arith.mulf %40, %41 : vector<8x32xf32>
    %cst_9 = arith.constant 1.33333337 : f32
    %43 = vector.broadcast %cst_9 : f32 to vector<8x32xf32>
    %44 = arith.mulf %23, %43 : vector<8x32xf32>
    %45 = tpu.iota {dimensions = array<i32: 0>} : vector<32x64xi32>
    %46 = tpu.iota {dimensions = array<i32: 1>} : vector<32x64xi32>
    %c2_i32_10 = arith.constant 2 : i32
    %47 = vector.broadcast %c2_i32_10 : i32 to vector<32x64xi32>
    %48 = arith.muli %47, %45 : vector<32x64xi32>
    %49 = arith.cmpi eq, %46, %48 : vector<32x64xi32>
    %50 = arith.extui %49 : vector<32x64xi1> to vector<32x64xi32>
    %51 = arith.sitofp %50 : vector<32x64xi32> to vector<32x64xf32>
    %c2_i32_11 = arith.constant 2 : i32
    %52 = vector.broadcast %c2_i32_11 : i32 to vector<32x64xi32>
    %53 = arith.muli %52, %45 : vector<32x64xi32>
    %c1_i32_12 = arith.constant 1 : i32
    %54 = vector.broadcast %c1_i32_12 : i32 to vector<32x64xi32>
    %55 = arith.addi %53, %54 : vector<32x64xi32>
    %56 = arith.cmpi eq, %46, %55 : vector<32x64xi32>
    %57 = arith.extui %56 : vector<32x64xi1> to vector<32x64xi32>
    %58 = arith.sitofp %57 : vector<32x64xi32> to vector<32x64xf32>
    %cst_13 = arith.constant dense<0.000000e+00> : vector<8x64xf32>
    %59 = tpu.matmul %44, %51, %cst_13 {dimension_numbers = #tpu.dot_dimension_numbers<[1], [0], [0], [1], [0, 0, 1, 1], [], []>} : vector<8x32xf32>, vector<32x64xf32>, vector<8x64xf32> -> vector<8x64xf32>
    %cst_14 = arith.constant dense<0.000000e+00> : vector<8x64xf32>
    %60 = tpu.matmul %42, %58, %cst_14 {dimension_numbers = #tpu.dot_dimension_numbers<[1], [0], [0], [1], [0, 0, 1, 1], [], []>} : vector<8x32xf32>, vector<32x64xf32>, vector<8x64xf32> -> vector<8x64xf32>
    %61 = arith.addf %59, %60 : vector<8x64xf32>
    %c0_15 = arith.constant 0 : index
    %c0_16 = arith.constant 0 : index
    %62 = vector.load %arg2[%c0_15, %c0_16] : memref<8x64xf32, #tpu.memory_space<vmem>>, vector<8x64xf32>
    tpu.vector_store %arg2[%c0_15, %c0_16], %61 {strides = array<i32>} : memref<8x64xf32, #tpu.memory_space<vmem>>, vector<8x64xf32>,
    return
  }
  func.func @transform_0(%arg0: i32) -> (i32, i32) {
    %c0_i32 = arith.constant 0 : i32
    %c0_i32_0 = arith.constant 0 : i32
    return %arg0, %c0_i32 : i32, i32
  }
  func.func @transform_1(%arg0: i32) -> (i32, i32) {
    %c0_i32 = arith.constant 0 : i32
    %c0_i32_0 = arith.constant 0 : i32
    return %arg0, %c0_i32 : i32, i32
  }
}

</mosaic_0001>

<llo_original>
// kernel: tpu_custom_call.1
$region0: #{tpu_custom_call.1}
  #allocation0 [shape = 'u32[]', space=smem, size = 0x4, offset = 0x4, fixed_abs, tag = 'smem constant byte address 0x4 - core index']
  #allocation1 [shape = 'u32[72,128]{1,0:T(1,128)}', space=vmem, size = 0x9000, scoped, tag = 'internal scratch']
  %s0 = inlined_call_operand.hbm [shape: f32[16,128], index: 0, kind: input, shape index: {}]
  %s1 = inlined_call_operand.hbm [shape: f32[16,64], index: 1, kind: output, shape index: {}]
  %s2 = sld [smem:[#allocation0]]
  $region41: #{tpu_custom_call.1} parent=0
    _
  %s4 = ssub.s32 1, %s2
  %s5 = scalar_select 0, %s4, %s2
  $region1: #{tpu_custom_call.1} parent=0
    #allocation2 [shape = 'u8[8192]{0}', space=vmem, size = 0x2000, scoped, tag = 'input window, operand 0']
    #allocation3 [shape = 's32[2]{0}', space=sflag, size = 0x8, scoped, tag = 'scoped memory for tpu_custom_call.1']
    #allocation4 [shape = 's32[2]{0}', space=sflag, size = 0x8, scoped, tag = 'scoped memory for tpu_custom_call.1']
    #allocation5 [shape = 'u8[8192]{0}', space=vmem, size = 0x2000, scoped, tag = 'output window, operand 0']
    %6 = vsyncpa [#allocation3], 0
    %s7 = scalar_lea.sflag [#allocation3], 1
    %8 = vsyncpa %s7, 0
    %9 = vsyncpa [#allocation4], 0
    %s10 = scalar_lea.sflag [#allocation4], 1
    %11 = vsyncpa %s10, 0
    loop: start=0, step=1, limit=4
    $region2: #{tpu_custom_call.1} parent=1 // loop_pre_header
      _
    $region3: #{tpu_custom_call.1} parent=1 // loop_header
      %s13 = sphi 0, %s17
      %p14 = scmp.ge.s32.totalorder %s13, 4
      %s23 = sphi 0, %s25
      %s26 = sphi 0, %s23
      %s27 = sphi 0, %s26
      %s43 = sphi 0, %s27
      %s49 = sphi 0, %s51
      %s52 = sphi 0, %s49
      %s53 = sphi 0, %s52
      %s69 = sphi 0, %s53
    $region4: #{tpu_custom_call.1} parent=1 // loop_header_branch
      %16 = sbr.rel (%p14) target = $region8
    $region5: #{tpu_custom_call.1} parent=1 // loop_body
      %s18 = ssub.s32 %s13, 1
      %s19 = ssub.s32 %s13, 2
      %s20 = sadd.s32 %s13, 1
      %s21 = ssub.s32 %s13, %s20
      %p22 = scmp.eq.s32.totalorder %s21, 0
      %s24 = sadd.s32 %s23, 1
      %s25 = scalar_select %p22, %s23, %s24
      %p28 = pneg %p22
      %p29 = scmp.eq.s32.totalorder %s13, 1
      %p30 = por %p28, %p29
      %p31 = scmp.ne.s32.totalorder %s23, %s26
      %p32 = scmp.eq.s32.totalorder %s13, 0
      %p33 = por %p31, %p32
      %p34 = scmp.ne.s32.totalorder %s23, %s26
      %p35 = scmp.eq.s32.totalorder %s18, 1
      %p36 = por %p34, %p35
      %p37 = scmp.ne.s32.totalorder %s26, %s27
      %p38 = scmp.eq.s32.totalorder %s18, 0
      %p39 = por %p37, %p38
      %p40 = scmp.ne.s32.totalorder %s26, %s27
      %p41 = scmp.eq.s32.totalorder %s19, 1
      %p42 = por %p40, %p41
      %p44 = scmp.ne.s32.totalorder %s27, %s43
      %p45 = scmp.eq.s32.totalorder %s19, 0
      %p46 = por %p44, %p45
      %s47 = ssub.s32 %s13, %s20
      %p48 = scmp.eq.s32.totalorder %s47, 0
      %s50 = sadd.s32 %s49, 1
      %s51 = scalar_select %p48, %s49, %s50
      %p54 = pneg %p48
      %p55 = scmp.eq.s32.totalorder %s13, 1
      %p56 = por %p54, %p55
      %p57 = scmp.ne.s32.totalorder %s49, %s52
      %p58 = scmp.eq.s32.totalorder %s13, 0
      %p59 = por %p57, %p58
      %p60 = scmp.ne.s32.totalorder %s49, %s52
      %p61 = scmp.eq.s32.totalorder %s18, 1
      %p62 = por %p60, %p61
      %p63 = scmp.ne.s32.totalorder %s52, %s53
      %p64 = scmp.eq.s32.totalorder %s18, 0
      %p65 = por %p63, %p64
      %p66 = scmp.ne.s32.totalorder %s52, %s53
      %p67 = scmp.eq.s32.totalorder %s19, 1
      %p68 = por %p66, %p67
      %p70 = scmp.ne.s32.totalorder %s53, %s69
      %p71 = scmp.eq.s32.totalorder %s19, 0
      %p72 = por %p70, %p71
      %p73 = scmp.le.s32.totalorder 1, %s13
      %p74 = scmp.lt.s32.totalorder %s13, 3
      %p75 = pnand %p73, %p74
      %p76 = pneg %p75
      // Predicated region
      $region9: #{tpu_custom_call.1} parent=5 // pred_check
        _
      $region10: #{tpu_custom_call.1} parent=5 // pred_check_branch
        %78 = sbr.rel (%p75) target = $region12
      $region11: #{tpu_custom_call.1} parent=5 // pred_region
        %s79 = ssub.s32 %s13, 1
      $region12: #{tpu_custom_call.1} parent=5 // pred_fallthru
        _
      %p80 = scmp.lt.s32.totalorder %s13, 2
      // Predicated region
      $region13: #{tpu_custom_call.1} parent=5 // pred_check
        %p81 = pneg %p80
      $region14: #{tpu_custom_call.1} parent=5 // pred_check_branch
        %83 = sbr.rel (%p81) target = $region16
      $region15: #{tpu_custom_call.1} parent=5 // pred_region
        // Predicated region
        $region17: #{tpu_custom_call.1} parent=15 // pred_check
          %p84 = pneg %p33
        $region18: #{tpu_custom_call.1} parent=15 // pred_check_branch
          %86 = sbr.rel (%p84) target = $region20
        $region19: #{tpu_custom_call.1} parent=15 // pred_region
          %s87 = sand.u32 %s23, 1
          %s88 = scalar_lea.sflag [#allocation3], %s87
          %s89 = sand.u32 %s23, 1
          %s90 = smul.addr %s89, 8
          %s91 = scalar_lea.vmem [#allocation2], %s90
          %93 = vsyncadd %s88, 0
          %s94 = smul.addr %s13, 8
          %s95 = scalar_lea.hbm %s0, %s94
          %s97 = sshll.u32 %s95, 4
          %s98 = int_to_ptr.hbm [resolvable:$true] %s97
          %s99 = sshll.u32 %s91, 4
          %s100 = int_to_ptr.vmem [resolvable:$true] %s99
          %102 = dma.hbm_to_vmem [thread:$0]  %s98, 128, %s100, %s88
        $region20: #{tpu_custom_call.1} parent=15 // pred_fallthru
          _
      $region16: #{tpu_custom_call.1} parent=5 // pred_fallthru
        _
      %p103 = scmp.le.s32.totalorder 1, %s13
      %p104 = scmp.lt.s32.totalorder %s13, 3
      %p105 = pnand %p103, %p104
      %p106 = pneg %p105
      // Predicated region
      $region21: #{tpu_custom_call.1} parent=5 // pred_check
        _
      $region22: #{tpu_custom_call.1} parent=5 // pred_check_branch
        %108 = sbr.rel (%p105) target = $region24
      $region23: #{tpu_custom_call.1} parent=5 // pred_region
        %s109 = ssub.s32 %s13, 1
        %s110 = sand.u32 %s26, 1
        %s111 = scalar_lea.sflag [#allocation3], %s110
        %s112 = sand.u32 %s26, 1
        %s113 = smul.addr %s112, 8
        %s114 = scalar_lea.vmem [#allocation2], %s113
        // Predicated region
        $region25: #{tpu_custom_call.1} parent=23 // pred_check
          %p115 = pneg %p39
        $region26: #{tpu_custom_call.1} parent=23 // pred_check_branch
          %117 = sbr.rel (%p115) target = $region28
        $region27: #{tpu_custom_call.1} parent=23 // pred_region
          %119 = dma.done %s111, 128
        $region28: #{tpu_custom_call.1} parent=23 // pred_fallthru
          _
        %s120 = sand.u32 %s26, 1
        %s121 = scalar_lea.sflag [#allocation3], %s120
        %s122 = sand.u32 %s26, 1
        %s123 = smul.addr %s122, 8
        %s124 = scalar_lea.vmem [#allocation2], %s123
        %p125 = pneg %p39
        %p126 = pneg %p36
        %p127 = pneg %p65
        %p128 = pneg %p62
        %s129 = sand.u32 %s52, 1
        %s130 = scalar_lea.sflag [#allocation4], %s129
        %s131 = sand.u32 %s52, 1
        %s132 = smul.addr %s131, 8
        %s133 = scalar_lea.vmem [#allocation5], %s132
        %v134 = vld [vmem:[%s114] sm:$0xff]
        %v135 = vlaneseq
        %v136 = vshrl.u32 %v135, 7
        %v137 = vadd.s32 %v136, 8
        %v138 = vadd.s32 %v136, 16
        %v139 = vadd.s32 %v136, 24
        %v140 = vadd.s32 %v136, 32
        %v141 = vadd.s32 %v136, 40
        %v142 = vadd.s32 %v136, 48
        %v143 = vadd.s32 %v136, 56
        %v144 = vadd.s32 %v136, 64
        %v145 = vadd.s32 %v136, 72
        %v146 = vadd.s32 %v136, 80
        %v147 = vadd.s32 %v136, 88
        %v148 = vadd.s32 %v136, 96
        %v149 = vadd.s32 %v136, 104
        %v150 = vadd.s32 %v136, 112
        %v151 = vadd.s32 %v136, 120
        %v152 = vlaneseq
        %v153 = vand.u32 %v152, 127
        %v154 = vmul.u32 %v153, 4
        %vm155 = vcmp.eq.s32.totalorder %v136, %v154
        %vm156 = vcmp.eq.s32.totalorder %v137, %v154
        %vm157 = vcmp.eq.s32.totalorder %v138, %v154
        %vm158 = vcmp.eq.s32.totalorder %v139, %v154
        %vm159 = vcmp.eq.s32.totalorder %v140, %v154
        %vm160 = vcmp.eq.s32.totalorder %v141, %v154
        %vm161 = vcmp.eq.s32.totalorder %v142, %v154
        %vm162 = vcmp.eq.s32.totalorder %v143, %v154
        %vm163 = vcmp.eq.s32.totalorder %v144, %v154
        %vm164 = vcmp.eq.s32.totalorder %v145, %v154
        %vm165 = vcmp.eq.s32.totalorder %v146, %v154
        %vm166 = vcmp.eq.s32.totalorder %v147, %v154
        %vm167 = vcmp.eq.s32.totalorder %v148, %v154
        %vm168 = vcmp.eq.s32.totalorder %v149, %v154
        %vm169 = vcmp.eq.s32.totalorder %v150, %v154
        %vm170 = vcmp.eq.s32.totalorder %v151, %v154
        %v171 = vsel %vm155, 1, 0
        %v172 = vsel %vm156, 1, 0
        %v173 = vsel %vm157, 1, 0
        %v174 = vsel %vm158, 1, 0
        %v175 = vsel %vm159, 1, 0
        %v176 = vsel %vm160, 1, 0
        %v177 = vsel %vm161, 1, 0
        %v178 = vsel %vm162, 1, 0
        %v179 = vsel %vm163, 1, 0
        %v180 = vsel %vm164, 1, 0
        %v181 = vsel %vm165, 1, 0
        %v182 = vsel %vm166, 1, 0
        %v183 = vsel %vm167, 1, 0
        %v184 = vsel %vm168, 1, 0
        %v185 = vsel %vm169, 1, 0
        %v186 = vsel %vm170, 1, 0
        %v187 = vcvt.s32.f32 %v171
        %v188 = vcvt.s32.f32 %v172
        %v189 = vcvt.s32.f32 %v173
        %v190 = vcvt.s32.f32 %v174
        %v191 = vcvt.s32.f32 %v175
        %v192 = vcvt.s32.f32 %v176
        %v193 = vcvt.s32.f32 %v177
        %v194 = vcvt.s32.f32 %v178
        %v195 = vcvt.s32.f32 %v179
        %v196 = vcvt.s32.f32 %v180
        %v197 = vcvt.s32.f32 %v181
        %v198 = vcvt.s32.f32 %v182
        %v199 = vcvt.s32.f32 %v183
        %v200 = vcvt.s32.f32 %v184
        %v201 = vcvt.s32.f32 %v185
        %v202 = vcvt.s32.f32 %v186
        %v203 = vadd.s32 %v154, 1
        %vm204 = vcmp.eq.s32.totalorder %v136, %v203
        %vm205 = vcmp.eq.s32.totalorder %v137, %v203
        %vm206 = vcmp.eq.s32.totalorder %v138, %v203
        %vm207 = vcmp.eq.s32.totalorder %v139, %v203
        %vm208 = vcmp.eq.s32.totalorder %v140, %v203
        %vm209 = vcmp.eq.s32.totalorder %v141, %v203
        %vm210 = vcmp.eq.s32.totalorder %v142, %v203
        %vm211 = vcmp.eq.s32.totalorder %v143, %v203
        %vm212 = vcmp.eq.s32.totalorder %v144, %v203
        %vm213 = vcmp.eq.s32.totalorder %v145, %v203
        %vm214 = vcmp.eq.s32.totalorder %v146, %v203
        %vm215 = vcmp.eq.s32.totalorder %v147, %v203
        %vm216 = vcmp.eq.s32.totalorder %v148, %v203
        %vm217 = vcmp.eq.s32.totalorder %v149, %v203
        %vm218 = vcmp.eq.s32.totalorder %v150, %v203
        %vm219 = vcmp.eq.s32.totalorder %v151, %v203
        %v220 = vsel %vm204, 1, 0
        %v221 = vsel %vm205, 1, 0
        %v222 = vsel %vm206, 1, 0
        %v223 = vsel %vm207, 1, 0
        %v224 = vsel %vm208, 1, 0
        %v225 = vsel %vm209, 1, 0
        %v226 = vsel %vm210, 1, 0
        %v227 = vsel %vm211, 1, 0
        %v228 = vsel %vm212, 1, 0
        %v229 = vsel %vm213, 1, 0
        %v230 = vsel %vm214, 1, 0
        %v231 = vsel %vm215, 1, 0
        %v232 = vsel %vm216, 1, 0
        %v233 = vsel %vm217, 1, 0
        %v234 = vsel %vm218, 1, 0
        %v235 = vsel %vm219, 1, 0
        %v236 = vcvt.s32.f32 %v220
        %v237 = vcvt.s32.f32 %v221
        %v238 = vcvt.s32.f32 %v222
        %v239 = vcvt.s32.f32 %v223
        %v240 = vcvt.s32.f32 %v224
        %v241 = vcvt.s32.f32 %v225
        %v242 = vcvt.s32.f32 %v226
        %v243 = vcvt.s32.f32 %v227
        %v244 = vcvt.s32.f32 %v228
        %v245 = vcvt.s32.f32 %v229
        %v246 = vcvt.s32.f32 %v230
        %v247 = vcvt.s32.f32 %v231
        %v248 = vcvt.s32.f32 %v232
        %v249 = vcvt.s32.f32 %v233
        %v250 = vcvt.s32.f32 %v234
        %v251 = vcvt.s32.f32 %v235
        %v252 = vadd.s32 %v154, 2
        %vm253 = vcmp.eq.s32.totalorder %v136, %v252
        %vm254 = vcmp.eq.s32.totalorder %v137, %v252
        %vm255 = vcmp.eq.s32.totalorder %v138, %v252
        %vm256 = vcmp.eq.s32.totalorder %v139, %v252
        %vm257 = vcmp.eq.s32.totalorder %v140, %v252
        %vm258 = vcmp.eq.s32.totalorder %v141, %v252
        %vm259 = vcmp.eq.s32.totalorder %v142, %v252
        %vm260 = vcmp.eq.s32.totalorder %v143, %v252
        %vm261 = vcmp.eq.s32.totalorder %v144, %v252
        %vm262 = vcmp.eq.s32.totalorder %v145, %v252
        %vm263 = vcmp.eq.s32.totalorder %v146, %v252
        %vm264 = vcmp.eq.s32.totalorder %v147, %v252
        %vm265 = vcmp.eq.s32.totalorder %v148, %v252
        %vm266 = vcmp.eq.s32.totalorder %v149, %v252
        %vm267 = vcmp.eq.s32.totalorder %v150, %v252
        %vm268 = vcmp.eq.s32.totalorder %v151, %v252
        %v269 = vsel %vm253, 1, 0
        %v270 = vsel %vm254, 1, 0
        %v271 = vsel %vm255, 1, 0
        %v272 = vsel %vm256, 1, 0
        %v273 = vsel %vm257, 1, 0
        %v274 = vsel %vm258, 1, 0
        %v275 = vsel %vm259, 1, 0
        %v276 = vsel %vm260, 1, 0
        %v277 = vsel %vm261, 1, 0
        %v278 = vsel %vm262, 1, 0
        %v279 = vsel %vm263, 1, 0
        %v280 = vsel %vm264, 1, 0
        %v281 = vsel %vm265, 1, 0
        %v282 = vsel %vm266, 1, 0
        %v283 = vsel %vm267, 1, 0
        %v284 = vsel %vm268, 1, 0
        %v285 = vcvt.s32.f32 %v269
        %v286 = vcvt.s32.f32 %v270
        %v287 = vcvt.s32.f32 %v271
        %v288 = vcvt.s32.f32 %v272
        %v289 = vcvt.s32.f32 %v273
        %v290 = vcvt.s32.f32 %v274
        %v291 = vcvt.s32.f32 %v275
        %v292 = vcvt.s32.f32 %v276
        %v293 = vcvt.s32.f32 %v277
        %v294 = vcvt.s32.f32 %v278
        %v295 = vcvt.s32.f32 %v279
        %v296 = vcvt.s32.f32 %v280
        %v297 = vcvt.s32.f32 %v281
        %v298 = vcvt.s32.f32 %v282
        %v299 = vcvt.s32.f32 %v283
        %v300 = vcvt.s32.f32 %v284
        %v301 = vadd.s32 %v154, 3
        %vm302 = vcmp.eq.s32.totalorder %v136, %v301
        %vm303 = vcmp.eq.s32.totalorder %v137, %v301
        %vm304 = vcmp.eq.s32.totalorder %v138, %v301
        %vm305 = vcmp.eq.s32.totalorder %v139, %v301
        %vm306 = vcmp.eq.s32.totalorder %v140, %v301
        %vm307 = vcmp.eq.s32.totalorder %v141, %v301
        %vm308 = vcmp.eq.s32.totalorder %v142, %v301
        %vm309 = vcmp.eq.s32.totalorder %v143, %v301
        %vm310 = vcmp.eq.s32.totalorder %v144, %v301
        %vm311 = vcmp.eq.s32.totalorder %v145, %v301
        %vm312 = vcmp.eq.s32.totalorder %v146, %v301
        %vm313 = vcmp.eq.s32.totalorder %v147, %v301
        %vm314 = vcmp.eq.s32.totalorder %v148, %v301
        %vm315 = vcmp.eq.s32.totalorder %v149, %v301
        %vm316 = vcmp.eq.s32.totalorder %v150, %v301
        %vm317 = vcmp.eq.s32.totalorder %v151, %v301
        %v318 = vsel %vm302, 1, 0
        %v319 = vsel %vm303, 1, 0
        %v320 = vsel %vm304, 1, 0
        %v321 = vsel %vm305, 1, 0
        %v322 = vsel %vm306, 1, 0
        %v323 = vsel %vm307, 1, 0
        %v324 = vsel %vm308, 1, 0
        %v325 = vsel %vm309, 1, 0
        %v326 = vsel %vm310, 1, 0
        %v327 = vsel %vm311, 1, 0
        %v328 = vsel %vm312, 1, 0
        %v329 = vsel %vm313, 1, 0
        %v330 = vsel %vm314, 1, 0
        %v331 = vsel %vm315, 1, 0
        %v332 = vsel %vm316, 1, 0
        %v333 = vsel %vm317, 1, 0
        %v334 = vcvt.s32.f32 %v318
        %v335 = vcvt.s32.f32 %v319
        %v336 = vcvt.s32.f32 %v320
        %v337 = vcvt.s32.f32 %v321
        %v338 = vcvt.s32.f32 %v322
        %v339 = vcvt.s32.f32 %v323
        %v340 = vcvt.s32.f32 %v324
        %v341 = vcvt.s32.f32 %v325
        %v342 = vcvt.s32.f32 %v326
        %v343 = vcvt.s32.f32 %v327
        %v344 = vcvt.s32.f32 %v328
        %v345 = vcvt.s32.f32 %v329
        %v346 = vcvt.s32.f32 %v330
        %v347 = vcvt.s32.f32 %v331
        %v348 = vcvt.s32.f32 %v332
        %v349 = vcvt.s32.f32 %v333
        %350 = vmatpush.msra.mxu0 %v202
        %351 = vmatpush.msra.mxu0 %v201
        %352 = vmatpush.msra.mxu0 %v200
        %353 = vmatpush.msra.mxu0 %v199
        %354 = vmatpush.msra.mxu0 %v198
        %355 = vmatpush.msra.mxu0 %v197
        %356 = vmatpush.msra.mxu0 %v196
        %357 = vmatpush.msra.mxu0 %v195
        %358 = vmatpush.msra.mxu0 %v194
        %359 = vmatpush.msra.mxu0 %v193
        %360 = vmatpush.msra.mxu0 %v192
        %361 = vmatpush.msra.mxu0 %v191
        %362 = vmatpush.msra.mxu0 %v190
        %363 = vmatpush.msra.mxu0 %v189
        %364 = vmatpush.msra.mxu0 %v188
        %365 = vmatpush.msra.mxu0 %v187
        %366 = vmatmul.f32.gmra.mxu0 %v134
        %v367 = vpop.f32.mrf.mxu0
        %v368 = vadd.f32 0.0, %v367
        %369 = vdwg.mxu0
        %370 = vmatpush.msra.mxu0 %v251
        %371 = vmatpush.msra.mxu0 %v250
        %372 = vmatpush.msra.mxu0 %v249
        %373 = vmatpush.msra.mxu0 %v248
        %374 = vmatpush.msra.mxu0 %v247
        %375 = vmatpush.msra.mxu0 %v246
        %376 = vmatpush.msra.mxu0 %v245
        %377 = vmatpush.msra.mxu0 %v244
        %378 = vmatpush.msra.mxu0 %v243
        %379 = vmatpush.msra.mxu0 %v242
        %380 = vmatpush.msra.mxu0 %v241
        %381 = vmatpush.msra.mxu0 %v240
        %382 = vmatpush.msra.mxu0 %v239
        %383 = vmatpush.msra.mxu0 %v238
        %384 = vmatpush.msra.mxu0 %v237
        %385 = vmatpush.msra.mxu0 %v236
        %386 = vmatmul.f32.gmra.mxu0 %v134
        %v387 = vpop.f32.mrf.mxu0
        %v388 = vadd.f32 0.0, %v387
        %389 = vdwg.mxu0
        %390 = vmatpush.msra.mxu0 %v300
        %391 = vmatpush.msra.mxu0 %v299
        %392 = vmatpush.msra.mxu0 %v298
        %393 = vmatpush.msra.mxu0 %v297
        %394 = vmatpush.msra.mxu0 %v296
        %395 = vmatpush.msra.mxu0 %v295
        %396 = vmatpush.msra.mxu0 %v294
        %397 = vmatpush.msra.mxu0 %v293
        %398 = vmatpush.msra.mxu0 %v292
        %399 = vmatpush.msra.mxu0 %v291
        %400 = vmatpush.msra.mxu0 %v290
        %401 = vmatpush.msra.mxu0 %v289
        %402 = vmatpush.msra.mxu0 %v288
        %403 = vmatpush.msra.mxu0 %v287
        %404 = vmatpush.msra.mxu0 %v286
        %405 = vmatpush.msra.mxu0 %v285
        %406 = vmatmul.f32.gmra.mxu0 %v134
        %v407 = vpop.f32.mrf.mxu0
        %v408 = vadd.f32 0.0, %v407
        %409 = vdwg.mxu0
        %410 = vmatpush.msra.mxu0 %v349
        %411 = vmatpush.msra.mxu0 %v348
        %412 = vmatpush.msra.mxu0 %v347
        %413 = vmatpush.msra.mxu0 %v346
        %414 = vmatpush.msra.mxu0 %v345
        %415 = vmatpush.msra.mxu0 %v344
        %416 = vmatpush.msra.mxu0 %v343
        %417 = vmatpush.msra.mxu0 %v342
        %418 = vmatpush.msra.mxu0 %v341
        %419 = vmatpush.msra.mxu0 %v340
        %420 = vmatpush.msra.mxu0 %v339
        %421 = vmatpush.msra.mxu0 %v338
        %422 = vmatpush.msra.mxu0 %v337
        %423 = vmatpush.msra.mxu0 %v336
        %424 = vmatpush.msra.mxu0 %v335
        %425 = vmatpush.msra.mxu0 %v334
        %426 = vmatmul.f32.gmra.mxu0 %v134
        %v427 = vpop.f32.mrf.mxu0
        %v428 = vadd.f32 0.0, %v427
        %429 = vdwg.mxu0
        %v430 = vmul.f32 %v368, 0.6666667
        %v431 = vmul.f32 %v430, %v430
        %v432 = vmul.f32 %v431, -0.5
        %v433 = vmul.f32 %v428, %v428
        %v434 = vrcp.pop %v433
        %v435 = vmul.f32 %v433, %v434
        %v436 = vsub.f32 1.0, %v435
        %v437 = vmul.f32 %v434, %v436
        %v438 = vadd.f32 %v434, %v437
        %vm439 = vweird.f32 %v433
        %vm440 = vweird.f32 %v434
        %vm441 = vmor %vm439, %vm440
        %v442 = vsel %vm441, %v434, %v438
        %v443 = vand.u32 2147483647, %v433
        %vm444 = vcmp.eq.f32.partialorder %v443, 8.507059e+37
        %v445 = vand.u32 %v433, 2147483648
        %v446 = vor.u32 1.1754944e-38, %v445
        %v447 = vsel %vm444, %v446, %v442
        %v448 = vmul.f32 %v432, %v447
        %v449 = vmul.f32 %v448, 1.442695
        %v450 = vpow.pop %v449
        %v451 = vmul.f32 %v408, 20.0
        %v452 = vmul.f32 %v451, %v450
        %v453 = vsub.f32 1.0, %v452
        %v454 = vrcp.pop %v453
        %v455 = vmul.f32 %v453, %v454
        %v456 = vsub.f32 1.0, %v455
        %v457 = vmul.f32 %v454, %v456
        %v458 = vadd.f32 %v454, %v457
        %vm459 = vweird.f32 %v453
        %vm460 = vweird.f32 %v454
        %vm461 = vmor %vm459, %vm460
        %v462 = vsel %vm461, %v454, %v458
        %v463 = vand.u32 2147483647, %v453
        %vm464 = vcmp.eq.f32.partialorder %v463, 8.507059e+37
        %v465 = vand.u32 %v453, 2147483648
        %v466 = vor.u32 1.1754944e-38, %v465
        %v467 = vsel %vm464, %v466, %v462
        %v468 = vmul.f32 %v388, %v467
        %v469 = vmul.f32 %v468, 0.5
        %v470 = vmul.f32 %v368, 1.3333334
        %v471 = vmul.u32 %v136, 2
        %v472 = vmul.u32 %v137, 2
        %v473 = vmul.u32 %v138, 2
        %v474 = vmul.u32 %v139, 2
        %vm475 = vcmp.eq.s32.totalorder %v153, %v471
        %vm476 = vcmp.eq.s32.totalorder %v153, %v472
        %vm477 = vcmp.eq.s32.totalorder %v153, %v473
        %vm478 = vcmp.eq.s32.totalorder %v153, %v474
        %v479 = vsel %vm475, 1, 0
        %v480 = vsel %vm476, 1, 0
        %v481 = vsel %vm477, 1, 0
        %v482 = vsel %vm478, 1, 0
        %v483 = vcvt.s32.f32 %v479
        %v484 = vcvt.s32.f32 %v480
        %v485 = vcvt.s32.f32 %v481
        %v486 = vcvt.s32.f32 %v482
        %v487 = vadd.s32 %v471, 1
        %v488 = vadd.s32 %v472, 1
        %v489 = vadd.s32 %v473, 1
        %v490 = vadd.s32 %v474, 1
        %vm491 = vcmp.eq.s32.totalorder %v153, %v487
        %vm492 = vcmp.eq.s32.totalorder %v153, %v488
        %vm493 = vcmp.eq.s32.totalorder %v153, %v489
        %vm494 = vcmp.eq.s32.totalorder %v153, %v490
        %v495 = vsel %vm491, 1, 0
        %v496 = vsel %vm492, 1, 0
        %v497 = vsel %vm493, 1, 0
        %v498 = vsel %vm494, 1, 0
        %v499 = vcvt.s32.f32 %v495
        %v500 = vcvt.s32.f32 %v496
        %v501 = vcvt.s32.f32 %v497
        %v502 = vcvt.s32.f32 %v498
        %vm503 = vcmask 261120
        %v505 = vsel %vm503, %v469, 0
        %507 = vmatpush.msra.mxu0 0.0
        %508 = vmatpush.msra.mxu0 0.0
        %509 = vmatpush.msra.mxu0 0.0
        %510 = vmatpush.msra.mxu0 0.0
        %511 = vmatpush.msra.mxu0 0.0
        %512 = vmatpush.msra.mxu0 0.0
        %513 = vmatpush.msra.mxu0 0.0
        %514 = vmatpush.msra.mxu0 0.0
        %515 = vmatpush.msra.mxu0 0.0
        %516 = vmatpush.msra.mxu0 0.0
        %517 = vmatpush.msra.mxu0 0.0
        %518 = vmatpush.msra.mxu0 0.0
        %519 = vmatpush.msra.mxu0 %v502
        %520 = vmatpush.msra.mxu0 %v501
        %521 = vmatpush.msra.mxu0 %v500
        %522 = vmatpush.msra.mxu0 %v499
        %523 = vmatmul.f32.gmra.mxu0 %v505
        %v524 = vpop.f32.mrf.mxu0
        %v525 = vadd.f32 0.0, %v524
        %526 = vdwg.mxu0
        %v528 = vsel %vm503, %v470, 0
        %530 = vmatpush.msra.mxu0 0.0
        %531 = vmatpush.msra.mxu0 0.0
        %532 = vmatpush.msra.mxu0 0.0
        %533 = vmatpush.msra.mxu0 0.0
        %534 = vmatpush.msra.mxu0 0.0
        %535 = vmatpush.msra.mxu0 0.0
        %536 = vmatpush.msra.mxu0 0.0
        %537 = vmatpush.msra.mxu0 0.0
        %538 = vmatpush.msra.mxu0 0.0
        %539 = vmatpush.msra.mxu0 0.0
        %540 = vmatpush.msra.mxu0 0.0
        %541 = vmatpush.msra.mxu0 0.0
        %542 = vmatpush.msra.mxu0 %v486
        %543 = vmatpush.msra.mxu0 %v485
        %544 = vmatpush.msra.mxu0 %v484
        %545 = vmatpush.msra.mxu0 %v483
        %546 = vmatmul.f32.gmra.mxu0 %v528
        %v547 = vpop.f32.mrf.mxu0
        %v548 = vadd.f32 %v525, %v547
        %549 = vdwg.mxu0
        %vm550 = vcmask 523264
        %551 = vst.msk [vmem:[%s133] sm:$0xff] %vm550, %v548
        %s552 = sand.u32 %s52, 1
        %s553 = scalar_lea.sflag [#allocation4], %s552
        %s554 = sand.u32 %s52, 1
        %s555 = smul.addr %s554, 8
        %s556 = scalar_lea.vmem [#allocation5], %s555
        // Predicated region
        $region29: #{tpu_custom_call.1} parent=23 // pred_check
          %p557 = pneg %p62
        $region30: #{tpu_custom_call.1} parent=23 // pred_check_branch
          %559 = sbr.rel (%p557) target = $region32
        $region31: #{tpu_custom_call.1} parent=23 // pred_region
          %561 = vsyncadd %s553, 0
          %s562 = smul.addr %s18, 8
          %s563 = scalar_lea.hbm %s1, %s562
          %s565 = sshll.u32 %s556, 4
          %s566 = int_to_ptr.vmem [resolvable:$true] %s565
          %s567 = sshll.u32 %s563, 4
          %s568 = int_to_ptr.hbm [resolvable:$true] %s567
          %570 = dma.vmem_to_hbm [thread:$0]  %s566, 128, %s568, %s553
        $region32: #{tpu_custom_call.1} parent=23 // pred_fallthru
          _
      $region24: #{tpu_custom_call.1} parent=5 // pred_fallthru
        _
      %p571 = scmp.le.s32.totalorder 2, %s13
      // Predicated region
      $region33: #{tpu_custom_call.1} parent=5 // pred_check
        %p572 = pneg %p571
      $region34: #{tpu_custom_call.1} parent=5 // pred_check_branch
        %574 = sbr.rel (%p572) target = $region36
      $region35: #{tpu_custom_call.1} parent=5 // pred_region
        %s575 = ssub.s32 %s13, 2
        // Predicated region
        $region37: #{tpu_custom_call.1} parent=35 // pred_check
          %p576 = pneg %p68
        $region38: #{tpu_custom_call.1} parent=35 // pred_check_branch
          %578 = sbr.rel (%p576) target = $region40
        $region39: #{tpu_custom_call.1} parent=35 // pred_region
          %s579 = sand.u32 %s53, 1
          %s580 = scalar_lea.sflag [#allocation4], %s579
          %s581 = sand.u32 %s53, 1
          %s582 = smul.addr %s581, 8
          %s583 = scalar_lea.vmem [#allocation5], %s582
          %585 = dma.done %s580, 128
        $region40: #{tpu_custom_call.1} parent=35 // pred_fallthru
          _
      $region36: #{tpu_custom_call.1} parent=5 // pred_fallthru
        _
    $region6: #{tpu_custom_call.1} parent=1 // loop_footer
      %s17 = sadd.s32 1, %s13
    $region7: #{tpu_custom_call.1} parent=1 // loop_footer_branch
      %12 = sbr.rel target = $region3
    $region8: #{tpu_custom_call.1} parent=1 // loop_exit
      _
    %586 = vsyncpa [#allocation3], 1
    %s587 = scalar_lea.sflag [#allocation3], 1
    %588 = vsyncpa %s587, 1
    %589 = vsyncpa [#allocation4], 1
    %s590 = scalar_lea.sflag [#allocation4], 1
    %591 = vsyncpa %s590, 1

</llo_original>
